<compile_context>
chip_gen: v6e
topology: v6e:2x2x1
jax: 0.10.0
libtpu: 0.0.40
codegen_flags: <defaults>
</compile_context>

<pallas_src>
from functools import partial

import jax
import jax.numpy as jnp
import numpy as np
from jax.experimental import pallas as pl
from jax.experimental.pallas import tpu as pltpu


def _round_up(x, m):
    return ((x + m - 1) // m) * m


def _disc_kernel(s_ref, a_ref, w1s_ref, w1a_ref, b1_ref, w2_ref, b2_ref, out_ref):
    # s:   (S, TB) f32      a:   (A, TB) f32        (batch on the lane axis)
    # w1s: (H, S)  f32      w1a: (A? no -> (H, A)) f32   b1: (H, 1) f32
    # w2:  (1, H)  f32      b2:  (1, 1)  f32 (SMEM scalar)
    # out: (1, TB) f32      (lane-dense store)
    h = jnp.dot(w1s_ref[...], s_ref[...], preferred_element_type=jnp.float32)
    h = h + jnp.dot(w1a_ref[...], a_ref[...], preferred_element_type=jnp.float32)
    h = jnp.tanh(h + b1_ref[...])                                   # (H, TB)
    y = jnp.dot(w2_ref[...], h, preferred_element_type=jnp.float32)  # (1, TB)
    out_ref[...] = jax.nn.sigmoid(y + b2_ref[0, 0])


@partial(jax.jit, static_argnames=("block_b",))
def discriminator_forward(state, action, params, *, block_b=4096):
    """state: (B, state_dim) float; action: (B, action_dim) or (B,) float."""
    if action.ndim == 1:
        action = action[:, None]

    B, S = state.shape
    A = action.shape[1]
    H = params["w1"].shape[1]

    # Feature-major weight layouts (transposes of tiny weight tensors; negligible).
    w1s = jnp.transpose(params["w1"][:S, :]).astype(jnp.float32)   # (H, S)
    w1a = jnp.transpose(params["w1"][S:, :]).astype(jnp.float32)   # (H, A)
    b1 = params["b1"].reshape(H, 1).astype(jnp.float32)            # (H, 1)
    w2 = params["w2"].reshape(1, H).astype(jnp.float32)            # (1, H)
    b2 = params["b2"].reshape(1, 1).astype(jnp.float32)            # (1, 1)

    # Batch tile: multiple of 128, capped at block_b; for moderate B split into
    # >=2 tiles so the "parallel" grid axis can use both v7x TensorCores.
    tb_cap = _round_up(block_b, 128)
    b_ceil = _round_up(max(B, 1), 128)
    if b_ceil <= tb_cap:
        tb = 128 if b_ceil <= 128 else _round_up(pl.cdiv(b_ceil, 2), 128)
    else:
        tb = tb_cap
    b_pad = _round_up(B, tb)

    if b_pad != B:
        pad = b_pad - B
        state = jnp.pad(state, ((0, pad), (0, 0)))
        action = jnp.pad(action, ((0, pad), (0, 0)))

    # Feature-major streams: (S, B_pad), (A, B_pad).  Done under the same jit so
    # the pad + transpose fuse; f32 is streamed directly (no bf16 cast pass).
    state_t = jnp.transpose(state).astype(jnp.float32)    # (S, B_pad)
    action_t = jnp.transpose(action).astype(jnp.float32)  # (A, B_pad)

    grid = (b_pad // tb,)

    out = pl.pallas_call(
        _disc_kernel,
        out_shape=jax.ShapeDtypeStruct((1, b_pad), jnp.float32),
        grid=grid,
        in_specs=[
            pl.BlockSpec((S, tb), lambda i: (0, i)),            # state tile (streamed)
            pl.BlockSpec((A, tb), lambda i: (0, i)),            # action tile (streamed)
            pl.BlockSpec((H, S), lambda i: (0, 0)),             # W1[:, :S].T (resident)
            pl.BlockSpec((H, A), lambda i: (0, 0)),             # W1[:, S:].T (resident)
            pl.BlockSpec((H, 1), lambda i: (0, 0)),             # b1          (resident)
            pl.BlockSpec((1, H), lambda i: (0, 0)),             # w2 row      (resident)
            pl.BlockSpec(memory_space=pltpu.MemorySpace.SMEM),  # b2 scalar in SMEM
        ],
        out_specs=pl.BlockSpec((1, tb), lambda i: (0, i)),      # lane-dense output slab
        compiler_params=pltpu.CompilerParams(
            dimension_semantics=("parallel",),   # shards batch tiles across v7x's 2 TCs
            # Per-step buffers are small even at TB=8192 in the feature-major
            # layout (~a few MiB incl. double buffering), so 32 MiB is safe on
            # v5e/v6e/v7x and leaves headroom.
            vmem_limit_bytes=32 * 1024 * 1024,
        ),
    )(state_t, action_t, w1s, w1a, b1, w2, b2)

    return out[0, :B].reshape(B, 1)


def init_params(key, state_dim, action_dim, hidden_dim):
    """Deterministic init mimicking nn.Linear's U(-1/sqrt(fan_in), 1/sqrt(fan_in))."""
    in_dim = state_dim + action_dim
    k1, k2, k3, k4 = jax.random.split(key, 4)
    lim1 = 1.0 / np.sqrt(in_dim)
    lim2 = 1.0 / np.sqrt(hidden_dim)
    return {
        # weights stored as [in, out] (pre-transposed relative to PyTorch)
        "w1": jax.random.uniform(k1, (in_dim, hidden_dim), jnp.float32, -lim1, lim1),
        "b1": jax.random.uniform(k2, (1, hidden_dim), jnp.float32, -lim1, lim1),
        "w2": jax.random.uniform(k3, (hidden_dim, 1), jnp.float32, -lim2, lim2),
        "b2": jax.random.uniform(k4, (1, 1), jnp.float32, -lim2, lim2),
    }


if __name__ == "__main__":
    state_dim, action_dim, hidden_dim = 12, 4, 32
    batch = 8

    key = jax.random.PRNGKey(0)
    kp, ks, ka = jax.random.split(key, 3)

    params = init_params(kp, state_dim, action_dim, hidden_dim)
    state = jax.random.normal(ks, (batch, state_dim), jnp.float32)
    action = jax.random.normal(ka, (batch, action_dim), jnp.float32)

    out = discriminator_forward(state, action, params)
    out = jax.block_until_ready(out)

    # pure-JAX f32 reference (kernel is f32 end-to-end now -> tight tolerance)
    x = jnp.concatenate([state, action], axis=1)
    ref = jax.nn.sigmoid(
        jnp.tanh(x @ params["w1"] + params["b1"]) @ params["w2"] + params["b2"]
    )
    np.testing.assert_allclose(np.asarray(out), np.asarray(ref), rtol=1e-5, atol=1e-5)

    assert out.shape == (batch, 1)
    print("KERNEL_OK")
</pallas_src>

<mosaic_0001>
module attributes {stable_mosaic.version = 11 : i64} {
  func.func @_disc_kernel(%arg0: i32, %arg1: memref<12x128xf32, #tpu.memory_space<vmem>>, %arg2: memref<4x128xf32, #tpu.memory_space<vmem>>, %arg3: memref<32x12xf32, #tpu.memory_space<vmem>>, %arg4: memref<32x4xf32, #tpu.memory_space<vmem>>, %arg5: memref<32x1xf32, #tpu.memory_space<vmem>>, %arg6: memref<1x32xf32, #tpu.memory_space<vmem>>, %arg7: memref<1x1xf32, #tpu.memory_space<smem>>, %arg8: memref<1x128xf32, #tpu.memory_space<vmem>>) attributes {dimension_semantics = [#tpu.dimension_semantics<parallel>], iteration_bounds = array<i64: 1>, scalar_prefetch = 0 : i64, scratch_operands = 0 : i64, tpu.core_type = #tpu.core_type<tc>, window_params = [{transform_indices = @transform_0, window_bounds = array<i64: 12, 128>}, {transform_indices = @transform_1, window_bounds = array<i64: 4, 128>}, {pipeline_mode = #tpu.pipeline_mode<synchronous>, transform_indices = @transform_2, window_bounds = array<i64: 32, 12>}, {pipeline_mode = #tpu.pipeline_mode<synchronous>, transform_indices = @transform_3, window_bounds = array<i64: 32, 4>}, {pipeline_mode = #tpu.pipeline_mode<synchronous>, transform_indices = @transform_4, window_bounds = array<i64: 32, 1>}, {pipeline_mode = #tpu.pipeline_mode<synchronous>, transform_indices = @transform_5, window_bounds = array<i64: 1, 32>}, {transform_indices = @transform_6, window_bounds = array<i64: 1, 1>}, {transform_indices = @transform_7, window_bounds = array<i64: 1, 128>}]} {
    %c0 = arith.constant 0 : index
    %c0_0 = arith.constant 0 : index
    %0 = vector.load %arg3[%c0, %c0_0] : memref<32x12xf32, #tpu.memory_space<vmem>>, vector<32x12xf32>
    %c0_1 = arith.constant 0 : index
    %c0_2 = arith.constant 0 : index
    %1 = vector.load %arg1[%c0_1, %c0_2] : memref<12x128xf32, #tpu.memory_space<vmem>>, vector<12x128xf32>
    %cst = arith.constant dense<0.000000e+00> : vector<32x128xf32>
    %2 = tpu.matmul %0, %1, %cst {dimension_numbers = #tpu.dot_dimension_numbers<[1], [0], [0], [1], [0, 0, 1, 1], [], []>} : vector<32x12xf32>, vector<12x128xf32>, vector<32x128xf32> -> vector<32x128xf32>
    %c0_3 = arith.constant 0 : index
    %c0_4 = arith.constant 0 : index
    %3 = vector.load %arg4[%c0_3, %c0_4] : memref<32x4xf32, #tpu.memory_space<vmem>>, vector<32x4xf32>
    %c0_5 = arith.constant 0 : index
    %c0_6 = arith.constant 0 : index
    %4 = vector.load %arg2[%c0_5, %c0_6] : memref<4x128xf32, #tpu.memory_space<vmem>>, vector<4x128xf32>
    %cst_7 = arith.constant dense<0.000000e+00> : vector<32x128xf32>
    %5 = tpu.matmul %3, %4, %cst_7 {dimension_numbers = #tpu.dot_dimension_numbers<[1], [0], [0], [1], [0, 0, 1, 1], [], []>} : vector<32x4xf32>, vector<4x128xf32>, vector<32x128xf32> -> vector<32x128xf32>
    %6 = arith.addf %2, %5 : vector<32x128xf32>
    %c0_8 = arith.constant 0 : index
    %c0_9 = arith.constant 0 : index
    %7 = vector.load %arg5[%c0_8, %c0_9] : memref<32x1xf32, #tpu.memory_space<vmem>>, vector<32x1xf32>
    %8 = vector.broadcast %7 : vector<32x1xf32> to vector<32x128xf32>
    %9 = arith.addf %6, %8 : vector<32x128xf32>
    %10 = math.tanh %9 : vector<32x128xf32>
    %c0_10 = arith.constant 0 : index
    %c0_11 = arith.constant 0 : index
    %11 = vector.load %arg6[%c0_10, %c0_11] : memref<1x32xf32, #tpu.memory_space<vmem>>, vector<1x32xf32>
    %cst_12 = arith.constant dense<0.000000e+00> : vector<1x128xf32>
    %12 = tpu.matmul %11, %10, %cst_12 {dimension_numbers = #tpu.dot_dimension_numbers<[1], [0], [0], [1], [0, 0, 1, 1], [], []>} : vector<1x32xf32>, vector<32x128xf32>, vector<1x128xf32> -> vector<1x128xf32>
    %c0_13 = arith.constant 0 : index
    %c0_14 = arith.constant 0 : index
    %13 = memref.load %arg7[%c0_13, %c0_14] : memref<1x1xf32, #tpu.memory_space<smem>>
    %14 = vector.broadcast %13 : f32 to vector<1x128xf32>
    %15 = arith.addf %12, %14 : vector<1x128xf32>
    %16 = arith.negf %15 : vector<1x128xf32>
    %17 = math.exp %16 : vector<1x128xf32>
    %cst_15 = arith.constant 1.000000e+00 : f32
    %18 = vector.broadcast %cst_15 : f32 to vector<1x128xf32>
    %19 = arith.addf %18, %17 : vector<1x128xf32>
    %20 = arith.divf %18, %19 : vector<1x128xf32>
    %c0_16 = arith.constant 0 : index
    %c0_17 = arith.constant 0 : index
    %21 = vector.load %arg8[%c0_16, %c0_17] : memref<1x128xf32, #tpu.memory_space<vmem>>, vector<1x128xf32>
    tpu.vector_store %arg8[%c0_16, %c0_17], %20 {strides = array<i32>} : memref<1x128xf32, #tpu.memory_space<vmem>>, vector<1x128xf32>,
    return
  }
  func.func @transform_0(%arg0: i32) -> (i32, i32) {
    %c0_i32 = arith.constant 0 : i32
    %c0_i32_0 = arith.constant 0 : i32
    return %c0_i32, %arg0 : i32, i32
  }
  func.func @transform_1(%arg0: i32) -> (i32, i32) {
    %c0_i32 = arith.constant 0 : i32
    %c0_i32_0 = arith.constant 0 : i32
    return %c0_i32, %arg0 : i32, i32
  }
  func.func @transform_2(%arg0: i32) -> (i32, i32) {
    %c0_i32 = arith.constant 0 : i32
    %c0_i32_0 = arith.constant 0 : i32
    %c0_i32_1 = arith.constant 0 : i32
    return %c0_i32, %c0_i32_0 : i32, i32
  }
  func.func @transform_3(%arg0: i32) -> (i32, i32) {
    %c0_i32 = arith.constant 0 : i32
    %c0_i32_0 = arith.constant 0 : i32
    %c0_i32_1 = arith.constant 0 : i32
    return %c0_i32, %c0_i32_0 : i32, i32
  }
  func.func @transform_4(%arg0: i32) -> (i32, i32) {
    %c0_i32 = arith.constant 0 : i32
    %c0_i32_0 = arith.constant 0 : i32
    %c0_i32_1 = arith.constant 0 : i32
    return %c0_i32, %c0_i32_0 : i32, i32
  }
  func.func @transform_5(%arg0: i32) -> (i32, i32) {
    %c0_i32 = arith.constant 0 : i32
    %c0_i32_0 = arith.constant 0 : i32
    %c0_i32_1 = arith.constant 0 : i32
    return %c0_i32, %c0_i32_0 : i32, i32
  }
  func.func @transform_6(%arg0: i32) -> (i32, i32) {
    %c0_i32 = arith.constant 0 : i32
    %c0_i32_0 = arith.constant 0 : i32
    %c0_i32_1 = arith.constant 0 : i32
    return %c0_i32, %c0_i32_0 : i32, i32
  }
  func.func @transform_7(%arg0: i32) -> (i32, i32) {
    %c0_i32 = arith.constant 0 : i32
    %c0_i32_0 = arith.constant 0 : i32
    return %c0_i32, %arg0 : i32, i32
  }
}

</mosaic_0001>

<llo_original>
// kernel: discriminator_forward.1
$region0: #{discriminator_forward.1}
  #allocation0 [shape = 'u32[]', space=smem, size = 0x4, offset = 0x4, fixed_abs, tag = 'smem constant byte address 0x4 - core index']
  #allocation1 [shape = 'u32[144,128]{1,0:T(1,128)}', space=vmem, size = 0x12000, scoped, tag = 'internal scratch']
  #allocation2 [shape = 'f32[1,1]{1,0:T(1,128)S(6)}', space=smem, size = 0x200, scoped, tag = 'scoped memory for discriminator_forward.1']
  %s0 = inlined_call_operand.vmem [shape: f32[12,128], index: 0, kind: input, shape index: {}]
  %s1 = inlined_call_operand.vmem [shape: f32[4,128], index: 1, kind: input, shape index: {}]
  %s2 = inlined_call_operand.vmem [shape: f32[32,12], index: 2, kind: input, shape index: {}]
  %s3 = inlined_call_operand.vmem [shape: f32[32,4], index: 3, kind: input, shape index: {}]
  %s4 = inlined_call_operand.vmem [shape: f32[32,1], index: 4, kind: input, shape index: {}]
  %s5 = inlined_call_operand.vmem [shape: f32[1,32], index: 5, kind: input, shape index: {}]
  %s6 = inlined_call_operand.<no memory space> [shape: f32[1,1], index: 6, kind: input, shape index: {}]
  %s7 = inlined_call_operand.vmem [shape: f32[1,128], index: 7, kind: output, shape index: {}]
  %s8 = sld [smem:[#allocation0]]
  $region38: #{discriminator_forward.1} parent=0
    _
  %s10 = ssub.s32 1, %s8
  %s11 = scalar_select 0, %s10, %s8
  %12 = sst [smem:[#allocation2]] %s6
  // Predicated region
  $region2: #{discriminator_forward.1} parent=0 // pred_check
    _
  $region3: #{discriminator_forward.1} parent=0 // pred_check_branch
    %14 = sbr.rel (0) target = $region5
  $region4: #{discriminator_forward.1} parent=0 // pred_region
    _
  $region5: #{discriminator_forward.1} parent=0 // pred_fallthru
    _
  // Predicated region
  $region6: #{discriminator_forward.1} parent=0 // pred_check
    _
  $region7: #{discriminator_forward.1} parent=0 // pred_check_branch
    %16 = sbr.rel (0) target = $region9
  $region8: #{discriminator_forward.1} parent=0 // pred_region
    _
  $region9: #{discriminator_forward.1} parent=0 // pred_fallthru
    _
  // Predicated region
  $region10: #{discriminator_forward.1} parent=0 // pred_check
    _
  $region11: #{discriminator_forward.1} parent=0 // pred_check_branch
    %18 = sbr.rel (0) target = $region13
  $region12: #{discriminator_forward.1} parent=0 // pred_region
    _
  $region13: #{discriminator_forward.1} parent=0 // pred_fallthru
    _
  // Predicated region
  $region14: #{discriminator_forward.1} parent=0 // pred_check
    _
  $region15: #{discriminator_forward.1} parent=0 // pred_check_branch
    %20 = sbr.rel (0) target = $region17
  $region16: #{discriminator_forward.1} parent=0 // pred_region
    _
  $region17: #{discriminator_forward.1} parent=0 // pred_fallthru
    _
  // Predicated region
  $region18: #{discriminator_forward.1} parent=0 // pred_check
    _
  $region19: #{discriminator_forward.1} parent=0 // pred_check_branch
    %22 = sbr.rel (0) target = $region21
  $region20: #{discriminator_forward.1} parent=0 // pred_region
    _
  $region21: #{discriminator_forward.1} parent=0 // pred_fallthru
    _
  // Predicated region
  $region22: #{discriminator_forward.1} parent=0 // pred_check
    _
  $region23: #{discriminator_forward.1} parent=0 // pred_check_branch
    %24 = sbr.rel (0) target = $region25
  $region24: #{discriminator_forward.1} parent=0 // pred_region
    _
  $region25: #{discriminator_forward.1} parent=0 // pred_fallthru
    _
  // Predicated region
  $region26: #{discriminator_forward.1} parent=0 // pred_check
    _
  $region27: #{discriminator_forward.1} parent=0 // pred_check_branch
    %26 = sbr.rel (0) target = $region29
  $region28: #{discriminator_forward.1} parent=0 // pred_region
    _
  $region29: #{discriminator_forward.1} parent=0 // pred_fallthru
    _
  %v27 = vld [vmem:[%s2] sm:$0xff]
  %v28 = vld [vmem:[%s2 + $0x8] sm:$0xff]
  %v29 = vld [vmem:[%s2 + $0x10] sm:$0xff]
  %v30 = vld [vmem:[%s2 + $0x18] sm:$0xff]
  %v31 = vld [vmem:[%s0] sm:$0xff]
  %v32 = vld [vmem:[%s0 + $0x8] sm:$0xf]
  %v33 = vld [vmem:[%s3] sm:$0xff]
  %v34 = vld [vmem:[%s3 + $0x8] sm:$0xff]
  %v35 = vld [vmem:[%s3 + $0x10] sm:$0xff]
  %v36 = vld [vmem:[%s3 + $0x18] sm:$0xff]
  %v37 = vld [vmem:[%s1] sm:$0xf]
  %vm38 = vcmask 31744
  %v40 = vsel %vm38, %v33, 0
  %v43 = vsel %vm38, %v34, 0
  %v46 = vsel %vm38, %v35, 0
  %v49 = vsel %vm38, %v36, 0
  %vm51 = vcmask 1043456
  %v53 = vsel %vm51, %v37, 0
  %55 = vmatprep.subr.mxu0 0.0
  %56 = vmatpush1.msra.mxu0 0.0
  %57 = vmatprep.subr.mxu0 0.0
  %58 = vmatpush1.msra.mxu0 0.0
  %59 = vmatprep.subr.mxu0 0.0
  %60 = vmatpush1.msra.mxu0 0.0
  %61 = vmatprep.subr.mxu0 0.0
  %62 = vmatpush1.msra.mxu0 0.0
  %63 = vmatprep.subr.mxu0 0.0
  %64 = vmatpush1.msra.mxu0 0.0
  %65 = vmatprep.subr.mxu0 0.0
  %66 = vmatpush1.msra.mxu0 0.0
  %67 = vmatprep.subr.mxu0 0.0
  %68 = vmatpush1.msra.mxu0 0.0
  %69 = vmatprep.subr.mxu0 0.0
  %70 = vmatpush1.msra.mxu0 0.0
  %71 = vmatprep.subr.mxu0 0.0
  %72 = vmatpush1.msra.mxu0 0.0
  %73 = vmatprep.subr.mxu0 0.0
  %74 = vmatpush1.msra.mxu0 0.0
  %75 = vmatprep.subr.mxu0 0.0
  %76 = vmatpush1.msra.mxu0 0.0
  %77 = vmatprep.subr.mxu0 0.0
  %78 = vmatpush1.msra.mxu0 0.0
  %79 = vmatprep.subr.mxu0 0.0
  %80 = vmatpush1.msra.mxu0 0.0
  %81 = vmatprep.subr.mxu0 0.0
  %82 = vmatpush1.msra.mxu0 0.0
  %83 = vmatprep.subr.mxu0 0.0
  %84 = vmatpush1.msra.mxu0 0.0
  %85 = vmatprep.subr.mxu0 0.0
  %86 = vmatpush1.msra.mxu0 %v53
  %87 = vmatprep.subr.mxu0 0.0
  %88 = vmatpush2.msra.mxu0 0.0
  %89 = vmatprep.subr.mxu0 0.0
  %90 = vmatpush2.msra.mxu0 0.0
  %91 = vmatprep.subr.mxu0 0.0
  %92 = vmatpush2.msra.mxu0 0.0
  %93 = vmatprep.subr.mxu0 0.0
  %94 = vmatpush2.msra.mxu0 0.0
  %95 = vmatprep.subr.mxu0 0.0
  %96 = vmatpush2.msra.mxu0 0.0
  %97 = vmatprep.subr.mxu0 0.0
  %98 = vmatpush2.msra.mxu0 0.0
  %99 = vmatprep.subr.mxu0 0.0
  %100 = vmatpush2.msra.mxu0 0.0
  %101 = vmatprep.subr.mxu0 0.0
  %102 = vmatpush2.msra.mxu0 0.0
  %103 = vmatprep.subr.mxu0 0.0
  %104 = vmatpush2.msra.mxu0 0.0
  %105 = vmatprep.subr.mxu0 0.0
  %106 = vmatpush2.msra.mxu0 0.0
  %107 = vmatprep.subr.mxu0 0.0
  %108 = vmatpush2.msra.mxu0 0.0
  %109 = vmatprep.subr.mxu0 0.0
  %110 = vmatpush2.msra.mxu0 0.0
  %111 = vmatprep.subr.mxu0 0.0
  %112 = vmatpush2.msra.mxu0 0.0
  %113 = vmatprep.subr.mxu0 0.0
  %114 = vmatpush2.msra.mxu0 0.0
  %115 = vmatprep.subr.mxu0 0.0
  %116 = vmatpush2.msra.mxu0 0.0
  %117 = vmatprep.subr.mxu0 0.0
  %118 = vmatpush2.msra.mxu0 0.0
  %119 = vmatprep.mubr.f32.mxu0 0.0
  %120 = vmatmul.mubr.f32.gmra.mxu0 %v40
  %v121 = vpop.f32.mrf.mxu0
  %v122 = vadd.f32 0.0, %v121
  %v123 = vpop.f32.mrf.mxu0
  %124 = vmatprep.mubr.f32.mxu0 0.0
  %125 = vmatmul.mubr.f32.gmra.mxu0 %v43
  %v126 = vpop.f32.mrf.mxu0
  %v127 = vadd.f32 0.0, %v126
  %v128 = vpop.f32.mrf.mxu0
  %129 = vmatprep.mubr.f32.mxu0 0.0
  %130 = vmatmul.mubr.f32.gmra.mxu0 %v46
  %v131 = vpop.f32.mrf.mxu0
  %v132 = vadd.f32 0.0, %v131
  %v133 = vpop.f32.mrf.mxu0
  %134 = vmatprep.mubr.f32.mxu0 0.0
  %135 = vmatmul.mubr.f32.gmra.mxu0 %v49
  %v136 = vpop.f32.mrf.mxu0
  %v137 = vadd.f32 0.0, %v136
  %v138 = vpop.f32.mrf.mxu0
  %139 = vdwg.mxu0
  %vm140 = vcmask 97280
  %v142 = vsel %vm140, %v27, 0
  %v145 = vsel %vm140, %v28, 0
  %v148 = vsel %vm140, %v29, 0
  %v151 = vsel %vm140, %v30, 0
  %v154 = vsel %vm51, %v32, 0
  %156 = vmatprep.subr.mxu0 0.0
  %157 = vmatpush1.msra.mxu0 0.0
  %158 = vmatprep.subr.mxu0 0.0
  %159 = vmatpush1.msra.mxu0 0.0
  %160 = vmatprep.subr.mxu0 0.0
  %161 = vmatpush1.msra.mxu0 0.0
  %162 = vmatprep.subr.mxu0 0.0
  %163 = vmatpush1.msra.mxu0 0.0
  %164 = vmatprep.subr.mxu0 0.0
  %165 = vmatpush1.msra.mxu0 0.0
  %166 = vmatprep.subr.mxu0 0.0
  %167 = vmatpush1.msra.mxu0 0.0
  %168 = vmatprep.subr.mxu0 0.0
  %169 = vmatpush1.msra.mxu0 0.0
  %170 = vmatprep.subr.mxu0 0.0
  %171 = vmatpush1.msra.mxu0 0.0
  %172 = vmatprep.subr.mxu0 0.0
  %173 = vmatpush1.msra.mxu0 0.0
  %174 = vmatprep.subr.mxu0 0.0
  %175 = vmatpush1.msra.mxu0 0.0
  %176 = vmatprep.subr.mxu0 0.0
  %177 = vmatpush1.msra.mxu0 0.0
  %178 = vmatprep.subr.mxu0 0.0
  %179 = vmatpush1.msra.mxu0 0.0
  %180 = vmatprep.subr.mxu0 0.0
  %181 = vmatpush1.msra.mxu0 0.0
  %182 = vmatprep.subr.mxu0 0.0
  %183 = vmatpush1.msra.mxu0 0.0
  %184 = vmatprep.subr.mxu0 0.0
  %185 = vmatpush1.msra.mxu0 %v154
  %186 = vmatprep.subr.mxu0 0.0
  %187 = vmatpush1.msra.mxu0 %v31
  %188 = vmatprep.subr.mxu0 0.0
  %189 = vmatpush2.msra.mxu0 0.0
  %190 = vmatprep.subr.mxu0 0.0
  %191 = vmatpush2.msra.mxu0 0.0
  %192 = vmatprep.subr.mxu0 0.0
  %193 = vmatpush2.msra.mxu0 0.0
  %194 = vmatprep.subr.mxu0 0.0
  %195 = vmatpush2.msra.mxu0 0.0
  %196 = vmatprep.subr.mxu0 0.0
  %197 = vmatpush2.msra.mxu0 0.0
  %198 = vmatprep.subr.mxu0 0.0
  %199 = vmatpush2.msra.mxu0 0.0
  %200 = vmatprep.subr.mxu0 0.0
  %201 = vmatpush2.msra.mxu0 0.0
  %202 = vmatprep.subr.mxu0 0.0
  %203 = vmatpush2.msra.mxu0 0.0
  %204 = vmatprep.subr.mxu0 0.0
  %205 = vmatpush2.msra.mxu0 0.0
  %206 = vmatprep.subr.mxu0 0.0
  %207 = vmatpush2.msra.mxu0 0.0
  %208 = vmatprep.subr.mxu0 0.0
  %209 = vmatpush2.msra.mxu0 0.0
  %210 = vmatprep.subr.mxu0 0.0
  %211 = vmatpush2.msra.mxu0 0.0
  %212 = vmatprep.subr.mxu0 0.0
  %213 = vmatpush2.msra.mxu0 0.0
  %214 = vmatprep.subr.mxu0 0.0
  %215 = vmatpush2.msra.mxu0 0.0
  %216 = vmatprep.subr.mxu0 0.0
  %217 = vmatpush2.msra.mxu0 0.0
  %218 = vmatprep.subr.mxu0 0.0
  %219 = vmatpush2.msra.mxu0 0.0
  %220 = vmatprep.mubr.f32.mxu0 0.0
  %221 = vmatmul.mubr.f32.gmra.mxu0 %v142
  %v222 = vpop.f32.mrf.mxu0
  %v223 = vadd.f32 %v122, %v222
  %v224 = vpop.f32.mrf.mxu0
  %225 = vmatprep.mubr.f32.mxu0 0.0
  %226 = vmatmul.mubr.f32.gmra.mxu0 %v145
  %v227 = vpop.f32.mrf.mxu0
  %v228 = vadd.f32 %v127, %v227
  %v229 = vpop.f32.mrf.mxu0
  %230 = vmatprep.mubr.f32.mxu0 0.0
  %231 = vmatmul.mubr.f32.gmra.mxu0 %v148
  %v232 = vpop.f32.mrf.mxu0
  %v233 = vadd.f32 %v132, %v232
  %v234 = vpop.f32.mrf.mxu0
  %235 = vmatprep.mubr.f32.mxu0 0.0
  %236 = vmatmul.mubr.f32.gmra.mxu0 %v151
  %v237 = vpop.f32.mrf.mxu0
  %v238 = vadd.f32 %v137, %v237
  %v239 = vpop.f32.mrf.mxu0
  %240 = vdwg.mxu0
  %v241 = vld [vmem:[%s4] sm:$0xff]
  %v242 = vld [vmem:[%s4 + $0x8] sm:$0xff]
  %v243 = vld [vmem:[%s4 + $0x10] sm:$0xff]
  %v244 = vld [vmem:[%s4 + $0x18] sm:$0xff]
  %246 = vset.pattern.permute.xlu0 0
  %247 = vperm.xlu0 %246, %v241
  %v248 = vpop.permute.xlu0 %247
  %251 = vset.pattern.permute.xlu0 0
  %252 = vperm.xlu0 %251, %v242
  %v253 = vpop.permute.xlu0 %252
  %256 = vset.pattern.permute.xlu0 0
  %257 = vperm.xlu0 %256, %v243
  %v258 = vpop.permute.xlu0 %257
  %261 = vset.pattern.permute.xlu0 0
  %262 = vperm.xlu0 %261, %v244
  %v263 = vpop.permute.xlu0 %262
  %v265 = vadd.f32 %v223, %v248
  %v266 = vadd.f32 %v228, %v253
  %v267 = vadd.f32 %v233, %v258
  %v268 = vadd.f32 %v238, %v263
  %v269 = vtanh.pop %v265
  %v270 = vtanh.pop %v266
  %v271 = vtanh.pop %v267
  %v272 = vtanh.pop %v268
  %v273 = vld [vmem:[%s5] sm:$0x1]
  %s274 = sld [smem:[#allocation2]]
  %v275 = vstv %s274
  %vm276 = vcmask 261120
  %v278 = vsel %vm276, %v273, 0
  %280 = vmatprep.subr.mxu0 0.0
  %281 = vmatpush1.msra.mxu0 0.0
  %282 = vmatprep.subr.mxu0 0.0
  %283 = vmatpush1.msra.mxu0 0.0
  %284 = vmatprep.subr.mxu0 0.0
  %285 = vmatpush1.msra.mxu0 0.0
  %286 = vmatprep.subr.mxu0 0.0
  %287 = vmatpush1.msra.mxu0 0.0
  %288 = vmatprep.subr.mxu0 0.0
  %289 = vmatpush1.msra.mxu0 0.0
  %290 = vmatprep.subr.mxu0 0.0
  %291 = vmatpush1.msra.mxu0 0.0
  %292 = vmatprep.subr.mxu0 0.0
  %293 = vmatpush1.msra.mxu0 0.0
  %294 = vmatprep.subr.mxu0 0.0
  %295 = vmatpush1.msra.mxu0 0.0
  %296 = vmatprep.subr.mxu0 0.0
  %297 = vmatpush1.msra.mxu0 0.0
  %298 = vmatprep.subr.mxu0 0.0
  %299 = vmatpush1.msra.mxu0 0.0
  %300 = vmatprep.subr.mxu0 0.0
  %301 = vmatpush1.msra.mxu0 0.0
  %302 = vmatprep.subr.mxu0 0.0
  %303 = vmatpush1.msra.mxu0 0.0
  %304 = vmatprep.subr.mxu0 0.0
  %305 = vmatpush1.msra.mxu0 %v272
  %306 = vmatprep.subr.mxu0 0.0
  %307 = vmatpush1.msra.mxu0 %v271
  %308 = vmatprep.subr.mxu0 0.0
  %309 = vmatpush1.msra.mxu0 %v270
  %310 = vmatprep.subr.mxu0 0.0
  %311 = vmatpush1.msra.mxu0 %v269
  %312 = vmatprep.subr.mxu0 0.0
  %313 = vmatpush2.msra.mxu0 0.0
  %314 = vmatprep.subr.mxu0 0.0
  %315 = vmatpush2.msra.mxu0 0.0
  %316 = vmatprep.subr.mxu0 0.0
  %317 = vmatpush2.msra.mxu0 0.0
  %318 = vmatprep.subr.mxu0 0.0
  %319 = vmatpush2.msra.mxu0 0.0
  %320 = vmatprep.subr.mxu0 0.0
  %321 = vmatpush2.msra.mxu0 0.0
  %322 = vmatprep.subr.mxu0 0.0
  %323 = vmatpush2.msra.mxu0 0.0
  %324 = vmatprep.subr.mxu0 0.0
  %325 = vmatpush2.msra.mxu0 0.0
  %326 = vmatprep.subr.mxu0 0.0
  %327 = vmatpush2.msra.mxu0 0.0
  %328 = vmatprep.subr.mxu0 0.0
  %329 = vmatpush2.msra.mxu0 0.0
  %330 = vmatprep.subr.mxu0 0.0
  %331 = vmatpush2.msra.mxu0 0.0
  %332 = vmatprep.subr.mxu0 0.0
  %333 = vmatpush2.msra.mxu0 0.0
  %334 = vmatprep.subr.mxu0 0.0
  %335 = vmatpush2.msra.mxu0 0.0
  %336 = vmatprep.subr.mxu0 0.0
  %337 = vmatpush2.msra.mxu0 0.0
  %338 = vmatprep.subr.mxu0 0.0
  %339 = vmatpush2.msra.mxu0 0.0
  %340 = vmatprep.subr.mxu0 0.0
  %341 = vmatpush2.msra.mxu0 0.0
  %342 = vmatprep.subr.mxu0 0.0
  %343 = vmatpush2.msra.mxu0 0.0
  %344 = vmatprep.mubr.f32.mxu0 0.0
  %345 = vmatmul.mubr.f32.gmra.mxu0 %v278
  %v346 = vpop.f32.mrf.mxu0
  %v347 = vadd.f32 %v275, %v346
  %v348 = vpop.f32.mrf.mxu0
  %349 = vdwg.mxu0
  %v350 = vxor.u32 %v347, 2147483648
  %v351 = vmul.f32 %v350, 1.442695
  %v352 = vpow.pop %v351
  %v353 = vadd.f32 %v352, 1.0
  %v354 = vrcp.pop %v353
  %v355 = vmul.f32 1.0, %v354
  %356 = vst [vmem:[%s7] sm:$0x1] %v355
  // Predicated region
  $region30: #{discriminator_forward.1} parent=0 // pred_check
    _
  $region31: #{discriminator_forward.1} parent=0 // pred_check_branch
    %358 = sbr.rel (0) target = $region33
  $region32: #{discriminator_forward.1} parent=0 // pred_region
    _
  $region33: #{discriminator_forward.1} parent=0 // pred_fallthru
    _
  // Predicated region
  $region34: #{discriminator_forward.1} parent=0 // pred_check
    _
  $region35: #{discriminator_forward.1} parent=0 // pred_check_branch
    %360 = sbr.rel (0) target = $region37
  $region36: #{discriminator_forward.1} parent=0 // pred_region
    _
  $region37: #{discriminator_forward.1} parent=0 // pred_fallthru
    _

</llo_original>
